<compile_context>
chip_gen: v6e
topology: v6e:2x2x1
jax: 0.10.0
libtpu: 0.0.40
codegen_flags: <defaults>
</compile_context>

<pallas_src>
import jax
import jax.numpy as jnp
from jax.experimental import pallas as pl
from jax.experimental.pallas import tpu as pltpu


_H1, _H2, _H3 = 256, 128, 64     # hidden widths of the PyTorch module
_SUBLANE_BF16 = 16               # bf16 sublane packing -> batch-tile granularity
_VMEM_BUDGET = 24 << 20          # conservative tile budget (safe on v5e/v6e/v7x)
_VMEM_LIMIT = 32 << 20           # <= v7x 64 MiB physical; raises v5e 16 MiB default
_MAX_TB = 4096                   # hard cap on rows per grid step


def _round_up(n, m):
    return ((n + m - 1) // m) * m


def _cdiv(a, b):
    return -(-a // b)


def _pick_tiling(batch, d_in):
    """Choose (tb, num_tiles) from a VMEM budget + megacore considerations."""
    # Resident weights (assume double-buffered copies since we don't rely on
    # pl.Buffered(1)); per-row cost covers the double-buffered bf16 x block,
    # the f32 output row and the f32/bf16 intermediate activations.
    weight_bytes = 2 * (2 * (d_in * _H1 + _H1 * _H2 + _H2 * _H3)
                        + 4 * (_H1 + _H2 + _H3 + _H3 + 1))
    per_row_bytes = (2 * 2 * d_in            # x double buffer (bf16)
                     + 2 * 4                 # output row (f32, double buffer)
                     + 4 * (_H1 + _H2 + _H3)  # f32 activations
                     + 2 * (_H1 + _H2))       # bf16 casts fed to the MXU
    avail = max(_VMEM_BUDGET - weight_bytes, per_row_bytes * 64)
    max_tb = max((avail // per_row_bytes) // _SUBLANE_BF16 * _SUBLANE_BF16,
                 _SUBLANE_BF16)
    max_tb = min(max_tb, _MAX_TB)

    # At least 2 tiles when B is big enough for each tile to hold >=256 rows,
    # so v7x's second TensorCore gets work and the x DMA overlaps compute.
    min_tiles = 2 if batch >= 512 else 1
    num_tiles = max(_cdiv(batch, max_tb), min_tiles)
    tb = _round_up(_cdiv(batch, num_tiles), _SUBLANE_BF16)
    tb = min(tb, max_tb)
    assert tb * num_tiles >= batch
    return tb, num_tiles


def _mlp_kernel(x_ref,
                w1_ref, b1_ref,
                w2_ref, b2_ref,
                w3_ref, b3_ref,
                w4_ref, b4_ref,
                o_ref):
    # fc1 / fc2 / fc3 on the MXU: bf16 inputs, f32 accumulation.
    x = x_ref[...]                                                      # (TB, D) bf16
    h = jnp.dot(x, w1_ref[...], preferred_element_type=jnp.float32)    # (TB, 256)
    h = jnp.maximum(h + b1_ref[...], 0.0)

    h = jnp.dot(h.astype(jnp.bfloat16), w2_ref[...],
                preferred_element_type=jnp.float32)                    # (TB, 128)
    h = jnp.maximum(h + b2_ref[...], 0.0)

    h = jnp.dot(h.astype(jnp.bfloat16), w3_ref[...],
                preferred_element_type=jnp.float32)                    # (TB, 64)
    h = jnp.maximum(h + b3_ref[...], 0.0)

    # fc4 (64 -> 1) as a lane-dense row: (1,64) @ (64,TB) -> (1,TB) logits.
    # Done in f32 to keep the final score close to PyTorch numerics.
    z = jnp.dot(w4_ref[...], h.T, preferred_element_type=jnp.float32)  # (1, TB)
    z = z + b4_ref[...]

    # exact sigmoid (EUP exp + divide); approx reciprocal skipped on purpose.
    sig = 1.0 / (1.0 + jnp.exp(-z))                                    # (1, TB)
    o_ref[...] = jnp.expand_dims(sig, 0)                               # (1, 1, TB)


@jax.jit
def trajectory_classifier_forward(x, params):
    """Forward pass of TrajectoryClassifier.

    x: any shape (B, ...) — flattened to (B, input_dim) like
       `x.contiguous().reshape(x.size(0), -1)` in the PyTorch module.
    params: dict with w1..w4 stored as (in_features, out_features) and
            b1..b4 as (1, out_features), float32 (PyTorch layout transposed).
    """
    B = x.shape[0]
    x2d = x.reshape(B, -1)
    d_in = x2d.shape[1]
    assert params["w1"].shape[0] == d_in

    # --- batch tiling (no feature padding: full-array last dim is legal) ---
    tb, num_tiles = _pick_tiling(B, d_in)
    b_pad = tb * num_tiles

    # Single fused pass over x: cast to bf16 + pad the batch dim only.
    xk = jnp.pad(x2d.astype(jnp.bfloat16), ((0, b_pad - B), (0, 0)))   # (Bp, D)

    # --- kernel-ready parameters: bf16 MXU weights, f32 biases / fc4 row ---
    w1 = params["w1"].astype(jnp.bfloat16)                  # (D, 256)
    b1 = params["b1"].astype(jnp.float32)                   # (1, 256)
    w2 = params["w2"].astype(jnp.bfloat16)                  # (256, 128)
    b2 = params["b2"].astype(jnp.float32)                   # (1, 128)
    w3 = params["w3"].astype(jnp.bfloat16)                  # (128, 64)
    b3 = params["b3"].astype(jnp.float32)                   # (1, 64)
    w4 = params["w4"].astype(jnp.float32).T                 # (1, 64) f32 row
    b4 = params["b4"].astype(jnp.float32).reshape(1, 1)     # (1, 1)

    operands = (xk, w1, b1, w2, b2, w3, b3, w4, b4)

    def _resident(arr):
        # whole-array block, constant index_map -> stays in VMEM across steps
        nd = arr.ndim
        return pl.BlockSpec(arr.shape, lambda i, _nd=nd: (0,) * _nd)

    in_specs = [
        pl.BlockSpec((tb, d_in), lambda i: (i, 0)),          # x: tiled over batch
        _resident(w1), _resident(b1),
        _resident(w2), _resident(b2),
        _resident(w3), _resident(b3),
        _resident(w4), _resident(b4),
    ]
    # Lane-dense output: one (1, tb) row per grid step.
    out_specs = pl.BlockSpec((1, 1, tb), lambda i: (i, 0, 0))

    flops = 2 * b_pad * (d_in * _H1 + _H1 * _H2 + _H2 * _H3 + _H3)
    bytes_accessed = sum(int(a.size) * a.dtype.itemsize for a in operands) + b_pad * 4

    out = pl.pallas_call(
        _mlp_kernel,
        out_shape=jax.ShapeDtypeStruct((num_tiles, 1, tb), jnp.float32),
        grid=(num_tiles,),
        in_specs=in_specs,
        out_specs=out_specs,
        compiler_params=pltpu.CompilerParams(
            dimension_semantics=("parallel",),
            vmem_limit_bytes=_VMEM_LIMIT),
        cost_estimate=pl.CostEstimate(
            flops=int(flops),
            transcendentals=int(b_pad),
            bytes_accessed=int(bytes_accessed)),
    )(*operands)

    return out.reshape(-1)[:B].reshape(B, 1)


def init_params(key, input_dim):
    """Deterministic parameter init (same shapes/distribution as PyTorch nn.Linear)."""
    dims = [(input_dim, _H1), (_H1, _H2), (_H2, _H3), (_H3, 1)]
    params = {}
    for i, (fan_in, fan_out) in enumerate(dims, start=1):
        key, kw, kb = jax.random.split(key, 3)
        bound = 1.0 / jnp.sqrt(float(fan_in))
        params[f"w{i}"] = jax.random.uniform(
            kw, (fan_in, fan_out), jnp.float32, minval=-bound, maxval=bound)
        params[f"b{i}"] = jax.random.uniform(
            kb, (1, fan_out), jnp.float32, minval=-bound, maxval=bound)
    return params


def reference_forward(x, params):
    """Pure-f32 reference (exact PyTorch semantics)."""
    B = x.shape[0]
    h = x.reshape(B, -1).astype(jnp.float32)
    h = jnp.maximum(h @ params["w1"] + params["b1"], 0.0)
    h = jnp.maximum(h @ params["w2"] + params["b2"], 0.0)
    h = jnp.maximum(h @ params["w3"] + params["b3"], 0.0)
    logits = h @ params["w4"] + params["b4"]
    return jax.nn.sigmoid(logits)


def reference_forward_bf16(x, params):
    """Reference mimicking the kernel's bf16-weight / f32-accumulate numerics."""
    B = x.shape[0]
    h = x.reshape(B, -1).astype(jnp.float32)

    def layer(h, w, b):
        out = jnp.dot(h.astype(jnp.bfloat16), w.astype(jnp.bfloat16),
                      preferred_element_type=jnp.float32) + b
        return jnp.maximum(out, 0.0)

    h = layer(h, params["w1"], params["b1"])
    h = layer(h, params["w2"], params["b2"])
    h = layer(h, params["w3"], params["b3"])
    logits = jnp.dot(h, params["w4"].astype(jnp.float32)) + params["b4"]
    return jax.nn.sigmoid(logits)


if __name__ == "__main__":
    # Module-consistent small shapes:
    #   state_dim=4, num_past=2, num_future=3
    #   input_dim = (num_past+1)*state_dim + (num_past+num_future+1)*state_dim = 36
    state_dim, num_past, num_future = 4, 2, 3
    input_dim = (num_past + 1) * state_dim + (num_past + num_future + 1) * state_dim
    batch = 2

    key = jax.random.PRNGKey(0)
    key, kx = jax.random.split(key)
    # x given as (B, 9, state_dim); the forward flattens it to (B, 36).
    x = jax.random.normal(kx, (batch, input_dim // state_dim, state_dim),
                          dtype=jnp.float32)
    params = init_params(key, input_dim)

    out = jax.block_until_ready(trajectory_classifier_forward(x, params))
    assert out.shape == (batch, 1), out.shape

    ref_bf16 = reference_forward_bf16(x, params)
    ref_f32 = reference_forward(x, params)
    # tight check vs. the bf16-matched reference, loose vs. exact-f32 reference
    assert jnp.allclose(out, ref_bf16, atol=5e-3, rtol=5e-3), (out, ref_bf16)
    assert jnp.allclose(out, ref_f32, atol=2e-2, rtol=2e-2), (out, ref_f32)

    # second call with a non-multiple-of-16 batch to exercise the batch-pad path
    key, kx2 = jax.random.split(key)
    x2 = jax.random.normal(kx2, (5, input_dim), dtype=jnp.float32)
    out2 = jax.block_until_ready(trajectory_classifier_forward(x2, params))
    assert out2.shape == (5, 1), out2.shape
    assert jnp.allclose(out2, reference_forward_bf16(x2, params),
                        atol=5e-3, rtol=5e-3)

    print("KERNEL_OK")
</pallas_src>

<mosaic_0001>
module attributes {stable_mosaic.version = 11 : i64} {
  func.func @_mlp_kernel(%arg0: i32, %arg1: memref<16x36xbf16, #tpu.memory_space<vmem>>, %arg2: memref<36x256xbf16, #tpu.memory_space<vmem>>, %arg3: memref<1x256xf32, #tpu.memory_space<vmem>>, %arg4: memref<256x128xbf16, #tpu.memory_space<vmem>>, %arg5: memref<1x128xf32, #tpu.memory_space<vmem>>, %arg6: memref<128x64xbf16, #tpu.memory_space<vmem>>, %arg7: memref<1x64xf32, #tpu.memory_space<vmem>>, %arg8: memref<1x64xf32, #tpu.memory_space<vmem>>, %arg9: memref<1x1xf32, #tpu.memory_space<vmem>>, %arg10: memref<1x1x16xf32, #tpu.memory_space<vmem>>) attributes {dimension_semantics = [#tpu.dimension_semantics<parallel>], iteration_bounds = array<i64: 1>, scalar_prefetch = 0 : i64, scratch_operands = 0 : i64, tpu.core_type = #tpu.core_type<tc>, window_params = [{transform_indices = @transform_0, window_bounds = array<i64: 16, 36>}, {pipeline_mode = #tpu.pipeline_mode<synchronous>, transform_indices = @transform_1, window_bounds = array<i64: 36, 256>}, {pipeline_mode = #tpu.pipeline_mode<synchronous>, transform_indices = @transform_2, window_bounds = array<i64: 1, 256>}, {pipeline_mode = #tpu.pipeline_mode<synchronous>, transform_indices = @transform_3, window_bounds = array<i64: 256, 128>}, {pipeline_mode = #tpu.pipeline_mode<synchronous>, transform_indices = @transform_4, window_bounds = array<i64: 1, 128>}, {pipeline_mode = #tpu.pipeline_mode<synchronous>, transform_indices = @transform_5, window_bounds = array<i64: 128, 64>}, {pipeline_mode = #tpu.pipeline_mode<synchronous>, transform_indices = @transform_6, window_bounds = array<i64: 1, 64>}, {pipeline_mode = #tpu.pipeline_mode<synchronous>, transform_indices = @transform_7, window_bounds = array<i64: 1, 64>}, {pipeline_mode = #tpu.pipeline_mode<synchronous>, transform_indices = @transform_8, window_bounds = array<i64: 1, 1>}, {transform_indices = @transform_9, window_bounds = array<i64: 1, 1, 16>}]} {
    %c0 = arith.constant 0 : index
    %c0_0 = arith.constant 0 : index
    %0 = vector.load %arg1[%c0, %c0_0] : memref<16x36xbf16, #tpu.memory_space<vmem>>, vector<16x36xbf16>
    %c0_1 = arith.constant 0 : index
    %c0_2 = arith.constant 0 : index
    %1 = vector.load %arg2[%c0_1, %c0_2] : memref<36x256xbf16, #tpu.memory_space<vmem>>, vector<36x256xbf16>
    %cst = arith.constant dense<0.000000e+00> : vector<16x256xf32>
    %2 = tpu.matmul %0, %1, %cst {dimension_numbers = #tpu.dot_dimension_numbers<[1], [0], [0], [1], [0, 0, 1, 1], [], []>} : vector<16x36xbf16>, vector<36x256xbf16>, vector<16x256xf32> -> vector<16x256xf32>
    %c0_3 = arith.constant 0 : index
    %c0_4 = arith.constant 0 : index
    %3 = vector.load %arg3[%c0_3, %c0_4] : memref<1x256xf32, #tpu.memory_space<vmem>>, vector<1x256xf32>
    %4 = vector.broadcast %3 : vector<1x256xf32> to vector<16x256xf32>
    %5 = arith.addf %2, %4 : vector<16x256xf32>
    %cst_5 = arith.constant 0.000000e+00 : f32
    %6 = vector.broadcast %cst_5 : f32 to vector<16x256xf32>
    %7 = arith.maximumf %5, %6 : vector<16x256xf32>
    %8 = arith.truncf %7 : vector<16x256xf32> to vector<16x256xbf16>
    %c0_6 = arith.constant 0 : index
    %c0_7 = arith.constant 0 : index
    %9 = vector.load %arg4[%c0_6, %c0_7] : memref<256x128xbf16, #tpu.memory_space<vmem>>, vector<256x128xbf16>
    %cst_8 = arith.constant dense<0.000000e+00> : vector<16x128xf32>
    %10 = tpu.matmul %8, %9, %cst_8 {dimension_numbers = #tpu.dot_dimension_numbers<[1], [0], [0], [1], [0, 0, 1, 1], [], []>} : vector<16x256xbf16>, vector<256x128xbf16>, vector<16x128xf32> -> vector<16x128xf32>
    %c0_9 = arith.constant 0 : index
    %c0_10 = arith.constant 0 : index
    %11 = vector.load %arg5[%c0_9, %c0_10] : memref<1x128xf32, #tpu.memory_space<vmem>>, vector<1x128xf32>
    %12 = vector.broadcast %11 : vector<1x128xf32> to vector<16x128xf32>
    %13 = arith.addf %10, %12 : vector<16x128xf32>
    %cst_11 = arith.constant 0.000000e+00 : f32
    %14 = vector.broadcast %cst_11 : f32 to vector<16x128xf32>
    %15 = arith.maximumf %13, %14 : vector<16x128xf32>
    %16 = arith.truncf %15 : vector<16x128xf32> to vector<16x128xbf16>
    %c0_12 = arith.constant 0 : index
    %c0_13 = arith.constant 0 : index
    %17 = vector.load %arg6[%c0_12, %c0_13] : memref<128x64xbf16, #tpu.memory_space<vmem>>, vector<128x64xbf16>
    %cst_14 = arith.constant dense<0.000000e+00> : vector<16x64xf32>
    %18 = tpu.matmul %16, %17, %cst_14 {dimension_numbers = #tpu.dot_dimension_numbers<[1], [0], [0], [1], [0, 0, 1, 1], [], []>} : vector<16x128xbf16>, vector<128x64xbf16>, vector<16x64xf32> -> vector<16x64xf32>
    %c0_15 = arith.constant 0 : index
    %c0_16 = arith.constant 0 : index
    %19 = vector.load %arg7[%c0_15, %c0_16] : memref<1x64xf32, #tpu.memory_space<vmem>>, vector<1x64xf32>
    %20 = vector.broadcast %19 : vector<1x64xf32> to vector<16x64xf32>
    %21 = arith.addf %18, %20 : vector<16x64xf32>
    %cst_17 = arith.constant 0.000000e+00 : f32
    %22 = vector.broadcast %cst_17 : f32 to vector<16x64xf32>
    %23 = arith.maximumf %21, %22 : vector<16x64xf32>
    %c0_18 = arith.constant 0 : index
    %c0_19 = arith.constant 0 : index
    %24 = vector.load %arg8[%c0_18, %c0_19] : memref<1x64xf32, #tpu.memory_space<vmem>>, vector<1x64xf32>
    %25 = tpu.transpose %23, [1, 0] : vector<16x64xf32> -> vector<64x16xf32>
    %cst_20 = arith.constant dense<0.000000e+00> : vector<1x16xf32>
    %26 = tpu.matmul %24, %25, %cst_20 {dimension_numbers = #tpu.dot_dimension_numbers<[1], [0], [0], [1], [0, 0, 1, 1], [], []>} : vector<1x64xf32>, vector<64x16xf32>, vector<1x16xf32> -> vector<1x16xf32>
    %c0_21 = arith.constant 0 : index
    %c0_22 = arith.constant 0 : index
    %27 = vector.load %arg9[%c0_21, %c0_22] : memref<1x1xf32, #tpu.memory_space<vmem>>, vector<1x1xf32>
    %28 = vector.broadcast %27 : vector<1x1xf32> to vector<1x16xf32>
    %29 = arith.addf %26, %28 : vector<1x16xf32>
    %cst_23 = arith.constant 0.000000e+00 : f32
    %30 = vector.broadcast %cst_23 : f32 to vector<1x16xf32>
    %31 = arith.subf %30, %29 : vector<1x16xf32>
    %32 = math.exp %31 : vector<1x16xf32>
    %cst_24 = arith.constant 1.000000e+00 : f32
    %33 = vector.broadcast %cst_24 : f32 to vector<1x16xf32>
    %34 = arith.addf %33, %32 : vector<1x16xf32>
    %cst_25 = arith.constant 1.000000e+00 : f32
    %35 = vector.broadcast %cst_25 : f32 to vector<1x16xf32>
    %36 = arith.divf %35, %34 : vector<1x16xf32>
    %37 = vector.shape_cast %36 : vector<1x16xf32> to vector<1x1x16xf32>
    %c0_26 = arith.constant 0 : index
    %c0_27 = arith.constant 0 : index
    %c0_28 = arith.constant 0 : index
    %38 = vector.load %arg10[%c0_26, %c0_27, %c0_28] : memref<1x1x16xf32, #tpu.memory_space<vmem>>, vector<1x1x16xf32>
    tpu.vector_store %arg10[%c0_26, %c0_27, %c0_28], %37 {strides = array<i32>} : memref<1x1x16xf32, #tpu.memory_space<vmem>>, vector<1x1x16xf32>,
    return
  }
  func.func @transform_0(%arg0: i32) -> (i32, i32) {
    %c0_i32 = arith.constant 0 : i32
    %c0_i32_0 = arith.constant 0 : i32
    return %arg0, %c0_i32 : i32, i32
  }
  func.func @transform_1(%arg0: i32) -> (i32, i32) {
    %c0_i32 = arith.constant 0 : i32
    %c0_i32_0 = arith.constant 0 : i32
    %c0_i32_1 = arith.constant 0 : i32
    return %c0_i32, %c0_i32_0 : i32, i32
  }
  func.func @transform_2(%arg0: i32) -> (i32, i32) {
    %c0_i32 = arith.constant 0 : i32
    %c0_i32_0 = arith.constant 0 : i32
    %c0_i32_1 = arith.constant 0 : i32
    return %c0_i32, %c0_i32_0 : i32, i32
  }
  func.func @transform_3(%arg0: i32) -> (i32, i32) {
    %c0_i32 = arith.constant 0 : i32
    %c0_i32_0 = arith.constant 0 : i32
    %c0_i32_1 = arith.constant 0 : i32
    return %c0_i32, %c0_i32_0 : i32, i32
  }
  func.func @transform_4(%arg0: i32) -> (i32, i32) {
    %c0_i32 = arith.constant 0 : i32
    %c0_i32_0 = arith.constant 0 : i32
    %c0_i32_1 = arith.constant 0 : i32
    return %c0_i32, %c0_i32_0 : i32, i32
  }
  func.func @transform_5(%arg0: i32) -> (i32, i32) {
    %c0_i32 = arith.constant 0 : i32
    %c0_i32_0 = arith.constant 0 : i32
    %c0_i32_1 = arith.constant 0 : i32
    return %c0_i32, %c0_i32_0 : i32, i32
  }
  func.func @transform_6(%arg0: i32) -> (i32, i32) {
    %c0_i32 = arith.constant 0 : i32
    %c0_i32_0 = arith.constant 0 : i32
    %c0_i32_1 = arith.constant 0 : i32
    return %c0_i32, %c0_i32_0 : i32, i32
  }
  func.func @transform_7(%arg0: i32) -> (i32, i32) {
    %c0_i32 = arith.constant 0 : i32
    %c0_i32_0 = arith.constant 0 : i32
    %c0_i32_1 = arith.constant 0 : i32
    return %c0_i32, %c0_i32_0 : i32, i32
  }
  func.func @transform_8(%arg0: i32) -> (i32, i32) {
    %c0_i32 = arith.constant 0 : i32
    %c0_i32_0 = arith.constant 0 : i32
    %c0_i32_1 = arith.constant 0 : i32
    return %c0_i32, %c0_i32_0 : i32, i32
  }
  func.func @transform_9(%arg0: i32) -> (i32, i32, i32) {
    %c0_i32 = arith.constant 0 : i32
    %c0_i32_0 = arith.constant 0 : i32
    %c0_i32_1 = arith.constant 0 : i32
    return %arg0, %c0_i32, %c0_i32_0 : i32, i32, i32
  }
}

</mosaic_0001>

<llo_original>
// kernel: trajectory_classifier_forward.1
$region0: #{trajectory_classifier_forward.1}
  #allocation0 [shape = 'u32[]', space=smem, size = 0x4, offset = 0x4, fixed_abs, tag = 'smem constant byte address 0x4 - core index']
  #allocation1 [shape = 'u32[144,128]{1,0:T(1,128)}', space=vmem, size = 0x12000, scoped, tag = 'internal scratch']
  #allocation2 [shape = 'f32[1,1]{1,0:T(1,128)S(1)}', space=vmem, size = 0x200, scoped, tag = 'scoped memory for trajectory_classifier_forward.1']
  %s0 = inlined_call_operand.vmem [shape: bf16[16,36], index: 0, kind: input, shape index: {}]
  %s1 = inlined_call_operand.vmem [shape: bf16[36,256], index: 1, kind: input, shape index: {}]
  %s2 = inlined_call_operand.vmem [shape: f32[1,256], index: 2, kind: input, shape index: {}]
  %s3 = inlined_call_operand.vmem [shape: bf16[256,128], index: 3, kind: input, shape index: {}]
  %s4 = inlined_call_operand.vmem [shape: f32[1,128], index: 4, kind: input, shape index: {}]
  %s5 = inlined_call_operand.vmem [shape: bf16[128,64], index: 5, kind: input, shape index: {}]
  %s6 = inlined_call_operand.vmem [shape: f32[1,64], index: 6, kind: input, shape index: {}]
  %s7 = inlined_call_operand.vmem [shape: f32[1,64], index: 7, kind: input, shape index: {}]
  %s8 = inlined_call_operand.<no memory space> [shape: f32[1,1], index: 8, kind: input, shape index: {}]
  %s9 = inlined_call_operand.vmem [shape: f32[1,1,16], index: 9, kind: output, shape index: {}]
  %s10 = sld [smem:[#allocation0]]
  $region46: #{trajectory_classifier_forward.1} parent=0
    _
  %s12 = ssub.s32 1, %s10
  %s13 = scalar_select 0, %s12, %s10
  %v14 = vstv %s8
  %15 = vst [vmem:[#allocation2] sm:$0x1] %v14
  // Predicated region
  $region2: #{trajectory_classifier_forward.1} parent=0 // pred_check
    _
  $region3: #{trajectory_classifier_forward.1} parent=0 // pred_check_branch
    %17 = sbr.rel (0) target = $region5
  $region4: #{trajectory_classifier_forward.1} parent=0 // pred_region
    _
  $region5: #{trajectory_classifier_forward.1} parent=0 // pred_fallthru
    _
  // Predicated region
  $region6: #{trajectory_classifier_forward.1} parent=0 // pred_check
    _
  $region7: #{trajectory_classifier_forward.1} parent=0 // pred_check_branch
    %19 = sbr.rel (0) target = $region9
  $region8: #{trajectory_classifier_forward.1} parent=0 // pred_region
    _
  $region9: #{trajectory_classifier_forward.1} parent=0 // pred_fallthru
    _
  // Predicated region
  $region10: #{trajectory_classifier_forward.1} parent=0 // pred_check
    _
  $region11: #{trajectory_classifier_forward.1} parent=0 // pred_check_branch
    %21 = sbr.rel (0) target = $region13
  $region12: #{trajectory_classifier_forward.1} parent=0 // pred_region
    _
  $region13: #{trajectory_classifier_forward.1} parent=0 // pred_fallthru
    _
  // Predicated region
  $region14: #{trajectory_classifier_forward.1} parent=0 // pred_check
    _
  $region15: #{trajectory_classifier_forward.1} parent=0 // pred_check_branch
    %23 = sbr.rel (0) target = $region17
  $region16: #{trajectory_classifier_forward.1} parent=0 // pred_region
    _
  $region17: #{trajectory_classifier_forward.1} parent=0 // pred_fallthru
    _
  // Predicated region
  $region18: #{trajectory_classifier_forward.1} parent=0 // pred_check
    _
  $region19: #{trajectory_classifier_forward.1} parent=0 // pred_check_branch
    %25 = sbr.rel (0) target = $region21
  $region20: #{trajectory_classifier_forward.1} parent=0 // pred_region
    _
  $region21: #{trajectory_classifier_forward.1} parent=0 // pred_fallthru
    _
  // Predicated region
  $region22: #{trajectory_classifier_forward.1} parent=0 // pred_check
    _
  $region23: #{trajectory_classifier_forward.1} parent=0 // pred_check_branch
    %27 = sbr.rel (0) target = $region25
  $region24: #{trajectory_classifier_forward.1} parent=0 // pred_region
    _
  $region25: #{trajectory_classifier_forward.1} parent=0 // pred_fallthru
    _
  // Predicated region
  $region26: #{trajectory_classifier_forward.1} parent=0 // pred_check
    _
  $region27: #{trajectory_classifier_forward.1} parent=0 // pred_check_branch
    %29 = sbr.rel (0) target = $region29
  $region28: #{trajectory_classifier_forward.1} parent=0 // pred_region
    _
  $region29: #{trajectory_classifier_forward.1} parent=0 // pred_fallthru
    _
  // Predicated region
  $region30: #{trajectory_classifier_forward.1} parent=0 // pred_check
    _
  $region31: #{trajectory_classifier_forward.1} parent=0 // pred_check_branch
    %31 = sbr.rel (0) target = $region33
  $region32: #{trajectory_classifier_forward.1} parent=0 // pred_region
    _
  $region33: #{trajectory_classifier_forward.1} parent=0 // pred_fallthru
    _
  // Predicated region
  $region34: #{trajectory_classifier_forward.1} parent=0 // pred_check
    _
  $region35: #{trajectory_classifier_forward.1} parent=0 // pred_check_branch
    %33 = sbr.rel (0) target = $region37
  $region36: #{trajectory_classifier_forward.1} parent=0 // pred_region
    _
  $region37: #{trajectory_classifier_forward.1} parent=0 // pred_fallthru
    _
  %v35 = vld [vmem:[%s0] sm:$0xf]
  %v36 = vld [vmem:[%s0 + $0x4] sm:$0xf]
  %v37 = vld [vmem:[%s1] sm:$0xff]
  %v38 = vld [vmem:[%s1 + $0x8] sm:$0xff]
  %v39 = vld [vmem:[%s1 + $0x10] sm:$0xff]
  %v40 = vld [vmem:[%s1 + $0x18] sm:$0xff]
  %v41 = vld [vmem:[%s1 + $0x20] sm:$0x33]
  %v42 = vld [vmem:[%s2] sm:$0x3]
  %v44 = vlaneseq
  %v45 = vshrl.u32 %v44, 7
  %v46 = vsub.s32 0, %v45
  %v47 = vrot.slane %v42, %v46
  %v48 = vlaneseq
  %v49 = vshrl.u32 %v48, 7
  %v50 = vsub.s32 1, %v49
  %v51 = vrot.slane %v42, %v50
  %v56 = vunpack.c.l.b16 %v35
  %v57 = vunpack.c.l.b16 %v36
  %v58 = vpack.c.b16 %v57, %v56
  %v64 = vunpack.c.l.b16 %v37
  %v65 = vunpack.c.h.b16 %v37
  %v66 = vunpack.c.l.b16 %v38
  %v67 = vunpack.c.h.b16 %v38
  %v68 = vunpack.c.l.b16 %v39
  %v69 = vunpack.c.h.b16 %v39
  %v70 = vunpack.c.l.b16 %v40
  %v71 = vunpack.c.h.b16 %v40
  %v72 = vunpack.c.l.b16 %v41
  %v73 = vunpack.c.h.b16 %v41
  %v74 = vpack.c.b16 %v66, %v64
  %v75 = vpack.c.b16 %v67, %v65
  %v76 = vpack.c.b16 %v70, %v68
  %v77 = vpack.c.b16 %v71, %v69
  %v78 = vpack.c.b16 %v72, %v72
  %v79 = vpack.c.b16 %v73, %v73
  %vm84 = vcmask 293888
  %v86 = vsel %vm84, %v58, 0
  %vm88 = vcmask 1041408
  %v90 = vsel %vm88, %v78, 0
  %v93 = vsel %vm88, %v79, 0
  %95 = vmatprep.subr.bf16.mxu0 0
  %96 = vmatpush1.bf16.msra.mxu0 0
  %97 = vmatprep.subr.bf16.mxu0 0
  %98 = vmatpush1.bf16.msra.mxu0 0
  %99 = vmatprep.subr.bf16.mxu0 0
  %100 = vmatpush1.bf16.msra.mxu0 0
  %101 = vmatprep.subr.bf16.mxu0 0
  %102 = vmatpush1.bf16.msra.mxu0 0
  %103 = vmatprep.subr.bf16.mxu0 0
  %104 = vmatpush1.bf16.msra.mxu0 0
  %105 = vmatprep.subr.bf16.mxu0 %v93
  %106 = vmatpush1.bf16.msra.mxu0 %v90
  %107 = vmatprep.subr.bf16.mxu0 %v77
  %108 = vmatpush1.bf16.msra.mxu0 %v76
  %109 = vmatprep.subr.bf16.mxu0 %v75
  %110 = vmatpush1.bf16.msra.mxu0 %v74
  %111 = vmatprep.subr.bf16.mxu0 0
  %112 = vmatpush2.bf16.msra.mxu0 0
  %113 = vmatprep.subr.bf16.mxu0 0
  %114 = vmatpush2.bf16.msra.mxu0 0
  %115 = vmatprep.subr.bf16.mxu0 0
  %116 = vmatpush2.bf16.msra.mxu0 0
  %117 = vmatprep.subr.bf16.mxu0 0
  %118 = vmatpush2.bf16.msra.mxu0 0
  %119 = vmatprep.subr.bf16.mxu0 0
  %120 = vmatpush2.bf16.msra.mxu0 0
  %121 = vmatprep.subr.bf16.mxu0 0
  %122 = vmatpush2.bf16.msra.mxu0 0
  %123 = vmatprep.subr.bf16.mxu0 0
  %124 = vmatpush2.bf16.msra.mxu0 0
  %125 = vmatprep.subr.bf16.mxu0 0
  %126 = vmatpush2.bf16.msra.mxu0 0
  %127 = vmatprep.mubr.bf16.mxu0 0
  %128 = vmatmul.mubr.bf16.gmra.mxu0 %v86
  %v129 = vpop.f32.mrf.mxu0
  %v130 = vadd.f32 %v47, %v129
  %v131 = vpop.f32.mrf.mxu0
  %v132 = vadd.f32 %v51, %v131
  %v133 = vpop.f32.mrf.mxu0
  %v134 = vadd.f32 %v47, %v133
  %v135 = vpop.f32.mrf.mxu0
  %v136 = vadd.f32 %v51, %v135
  %137 = vdwg.mxu0
  %v138 = vmax.f32 %v130, 0.0
  %v139 = vmax.f32 %v132, 0.0
  %v140 = vmax.f32 %v134, 0.0
  %v141 = vmax.f32 %v136, 0.0
  %v142 = vpack.c.bf16 %v140, %v138
  %v143 = vpack.c.bf16 %v141, %v139
  %v144 = vld [vmem:[%s3] sm:$0xf]
  %v145 = vld [vmem:[%s3 + $0x4] sm:$0xf]
  %v146 = vld [vmem:[%s3 + $0x8] sm:$0xf]
  %v147 = vld [vmem:[%s3 + $0xc] sm:$0xf]
  %v148 = vld [vmem:[%s3 + $0x10] sm:$0xf]
  %v149 = vld [vmem:[%s3 + $0x14] sm:$0xf]
  %v150 = vld [vmem:[%s3 + $0x18] sm:$0xf]
  %v151 = vld [vmem:[%s3 + $0x1c] sm:$0xf]
  %v152 = vld [vmem:[%s3 + $0x20] sm:$0xf]
  %v153 = vld [vmem:[%s3 + $0x24] sm:$0xf]
  %v154 = vld [vmem:[%s3 + $0x28] sm:$0xf]
  %v155 = vld [vmem:[%s3 + $0x2c] sm:$0xf]
  %v156 = vld [vmem:[%s3 + $0x30] sm:$0xf]
  %v157 = vld [vmem:[%s3 + $0x34] sm:$0xf]
  %v158 = vld [vmem:[%s3 + $0x38] sm:$0xf]
  %v159 = vld [vmem:[%s3 + $0x3c] sm:$0xf]
  %v160 = vld [vmem:[%s3 + $0x40] sm:$0xf]
  %v161 = vld [vmem:[%s3 + $0x44] sm:$0xf]
  %v162 = vld [vmem:[%s3 + $0x48] sm:$0xf]
  %v163 = vld [vmem:[%s3 + $0x4c] sm:$0xf]
  %v164 = vld [vmem:[%s3 + $0x50] sm:$0xf]
  %v165 = vld [vmem:[%s3 + $0x54] sm:$0xf]
  %v166 = vld [vmem:[%s3 + $0x58] sm:$0xf]
  %v167 = vld [vmem:[%s3 + $0x5c] sm:$0xf]
  %v168 = vld [vmem:[%s3 + $0x60] sm:$0xf]
  %v169 = vld [vmem:[%s3 + $0x64] sm:$0xf]
  %v170 = vld [vmem:[%s3 + $0x68] sm:$0xf]
  %v171 = vld [vmem:[%s3 + $0x6c] sm:$0xf]
  %v172 = vld [vmem:[%s3 + $0x70] sm:$0xf]
  %v173 = vld [vmem:[%s3 + $0x74] sm:$0xf]
  %v174 = vld [vmem:[%s3 + $0x78] sm:$0xf]
  %v175 = vld [vmem:[%s3 + $0x7c] sm:$0xf]
  %v176 = vld [vmem:[%s4] sm:$0x1]
  %v178 = vlaneseq
  %v179 = vshrl.u32 %v178, 7
  %v180 = vsub.s32 0, %v179
  %v181 = vrot.slane %v176, %v180
  %v215 = vunpack.c.l.b16 %v144
  %v216 = vunpack.c.l.b16 %v145
  %v217 = vunpack.c.l.b16 %v146
  %v218 = vunpack.c.l.b16 %v147
  %v219 = vunpack.c.l.b16 %v148
  %v220 = vunpack.c.l.b16 %v149
  %v221 = vunpack.c.l.b16 %v150
  %v222 = vunpack.c.l.b16 %v151
  %v223 = vunpack.c.l.b16 %v152
  %v224 = vunpack.c.l.b16 %v153
  %v225 = vunpack.c.l.b16 %v154
  %v226 = vunpack.c.l.b16 %v155
  %v227 = vunpack.c.l.b16 %v156
  %v228 = vunpack.c.l.b16 %v157
  %v229 = vunpack.c.l.b16 %v158
  %v230 = vunpack.c.l.b16 %v159
  %v231 = vunpack.c.l.b16 %v160
  %v232 = vunpack.c.l.b16 %v161
  %v233 = vunpack.c.l.b16 %v162
  %v234 = vunpack.c.l.b16 %v163
  %v235 = vunpack.c.l.b16 %v164
  %v236 = vunpack.c.l.b16 %v165
  %v237 = vunpack.c.l.b16 %v166
  %v238 = vunpack.c.l.b16 %v167
  %v239 = vunpack.c.l.b16 %v168
  %v240 = vunpack.c.l.b16 %v169
  %v241 = vunpack.c.l.b16 %v170
  %v242 = vunpack.c.l.b16 %v171
  %v243 = vunpack.c.l.b16 %v172
  %v244 = vunpack.c.l.b16 %v173
  %v245 = vunpack.c.l.b16 %v174
  %v246 = vunpack.c.l.b16 %v175
  %v247 = vpack.c.b16 %v216, %v215
  %v248 = vpack.c.b16 %v218, %v217
  %v249 = vpack.c.b16 %v220, %v219
  %v250 = vpack.c.b16 %v222, %v221
  %v251 = vpack.c.b16 %v224, %v223
  %v252 = vpack.c.b16 %v226, %v225
  %v253 = vpack.c.b16 %v228, %v227
  %v254 = vpack.c.b16 %v230, %v229
  %v255 = vpack.c.b16 %v232, %v231
  %v256 = vpack.c.b16 %v234, %v233
  %v257 = vpack.c.b16 %v236, %v235
  %v258 = vpack.c.b16 %v238, %v237
  %v259 = vpack.c.b16 %v240, %v239
  %v260 = vpack.c.b16 %v242, %v241
  %v261 = vpack.c.b16 %v244, %v243
  %v262 = vpack.c.b16 %v246, %v245
  %279 = vmatprep.subr.bf16.mxu0 0
  %280 = vmatpush1.bf16.msra.mxu0 %v254
  %281 = vmatprep.subr.bf16.mxu0 0
  %282 = vmatpush1.bf16.msra.mxu0 %v253
  %283 = vmatprep.subr.bf16.mxu0 0
  %284 = vmatpush1.bf16.msra.mxu0 %v252
  %285 = vmatprep.subr.bf16.mxu0 0
  %286 = vmatpush1.bf16.msra.mxu0 %v251
  %287 = vmatprep.subr.bf16.mxu0 0
  %288 = vmatpush1.bf16.msra.mxu0 %v250
  %289 = vmatprep.subr.bf16.mxu0 0
  %290 = vmatpush1.bf16.msra.mxu0 %v249
  %291 = vmatprep.subr.bf16.mxu0 0
  %292 = vmatpush1.bf16.msra.mxu0 %v248
  %293 = vmatprep.subr.bf16.mxu0 0
  %294 = vmatpush1.bf16.msra.mxu0 %v247
  %295 = vmatprep.subr.bf16.mxu0 0
  %296 = vmatpush2.bf16.msra.mxu0 %v262
  %297 = vmatprep.subr.bf16.mxu0 0
  %298 = vmatpush2.bf16.msra.mxu0 %v261
  %299 = vmatprep.subr.bf16.mxu0 0
  %300 = vmatpush2.bf16.msra.mxu0 %v260
  %301 = vmatprep.subr.bf16.mxu0 0
  %302 = vmatpush2.bf16.msra.mxu0 %v259
  %303 = vmatprep.subr.bf16.mxu0 0
  %304 = vmatpush2.bf16.msra.mxu0 %v258
  %305 = vmatprep.subr.bf16.mxu0 0
  %306 = vmatpush2.bf16.msra.mxu0 %v257
  %307 = vmatprep.subr.bf16.mxu0 0
  %308 = vmatpush2.bf16.msra.mxu0 %v256
  %309 = vmatprep.subr.bf16.mxu0 0
  %310 = vmatpush2.bf16.msra.mxu0 %v255
  %311 = vmatprep.mubr.bf16.mxu0 %v143
  %312 = vmatmul.mubr.bf16.gmra.mxu0 %v142
  %v313 = vpop.f32.mrf.mxu0
  %v314 = vadd.f32 %v181, %v313
  %v315 = vpop.f32.mrf.mxu0
  %v316 = vpop.f32.mrf.mxu0
  %v317 = vadd.f32 %v181, %v316
  %v318 = vpop.f32.mrf.mxu0
  %319 = vdwg.mxu0
  %v320 = vmax.f32 %v314, 0.0
  %v321 = vmax.f32 %v317, 0.0
  %v322 = vpack.c.bf16 %v321, %v320
  %v323 = vld [vmem:[%s5] sm:$0xf]
  %v324 = vld [vmem:[%s5 + $0x4] sm:$0xf]
  %v325 = vld [vmem:[%s5 + $0x8] sm:$0xf]
  %v326 = vld [vmem:[%s5 + $0xc] sm:$0xf]
  %v327 = vld [vmem:[%s5 + $0x10] sm:$0xf]
  %v328 = vld [vmem:[%s5 + $0x14] sm:$0xf]
  %v329 = vld [vmem:[%s5 + $0x18] sm:$0xf]
  %v330 = vld [vmem:[%s5 + $0x1c] sm:$0xf]
  %v331 = vld [vmem:[%s5 + $0x20] sm:$0xf]
  %v332 = vld [vmem:[%s5 + $0x24] sm:$0xf]
  %v333 = vld [vmem:[%s5 + $0x28] sm:$0xf]
  %v334 = vld [vmem:[%s5 + $0x2c] sm:$0xf]
  %v335 = vld [vmem:[%s5 + $0x30] sm:$0xf]
  %v336 = vld [vmem:[%s5 + $0x34] sm:$0xf]
  %v337 = vld [vmem:[%s5 + $0x38] sm:$0xf]
  %v338 = vld [vmem:[%s5 + $0x3c] sm:$0xf]
  %v339 = vld [vmem:[%s6] sm:$0x1]
  %v341 = vlaneseq
  %v342 = vshrl.u32 %v341, 7
  %v343 = vsub.s32 0, %v342
  %v344 = vrot.slane %v339, %v343
  %v362 = vunpack.c.l.b16 %v323
  %v363 = vunpack.c.l.b16 %v324
  %v364 = vunpack.c.l.b16 %v325
  %v365 = vunpack.c.l.b16 %v326
  %v366 = vunpack.c.l.b16 %v327
  %v367 = vunpack.c.l.b16 %v328
  %v368 = vunpack.c.l.b16 %v329
  %v369 = vunpack.c.l.b16 %v330
  %v370 = vunpack.c.l.b16 %v331
  %v371 = vunpack.c.l.b16 %v332
  %v372 = vunpack.c.l.b16 %v333
  %v373 = vunpack.c.l.b16 %v334
  %v374 = vunpack.c.l.b16 %v335
  %v375 = vunpack.c.l.b16 %v336
  %v376 = vunpack.c.l.b16 %v337
  %v377 = vunpack.c.l.b16 %v338
  %v378 = vpack.c.b16 %v363, %v362
  %v379 = vpack.c.b16 %v365, %v364
  %v380 = vpack.c.b16 %v367, %v366
  %v381 = vpack.c.b16 %v369, %v368
  %v382 = vpack.c.b16 %v371, %v370
  %v383 = vpack.c.b16 %v373, %v372
  %v384 = vpack.c.b16 %v375, %v374
  %v385 = vpack.c.b16 %v377, %v376
  %394 = vmatprep.subr.bf16.mxu0 0
  %395 = vmatpush1.bf16.msra.mxu0 %v385
  %396 = vmatprep.subr.bf16.mxu0 0
  %397 = vmatpush1.bf16.msra.mxu0 %v384
  %398 = vmatprep.subr.bf16.mxu0 0
  %399 = vmatpush1.bf16.msra.mxu0 %v383
  %400 = vmatprep.subr.bf16.mxu0 0
  %401 = vmatpush1.bf16.msra.mxu0 %v382
  %402 = vmatprep.subr.bf16.mxu0 0
  %403 = vmatpush1.bf16.msra.mxu0 %v381
  %404 = vmatprep.subr.bf16.mxu0 0
  %405 = vmatpush1.bf16.msra.mxu0 %v380
  %406 = vmatprep.subr.bf16.mxu0 0
  %407 = vmatpush1.bf16.msra.mxu0 %v379
  %408 = vmatprep.subr.bf16.mxu0 0
  %409 = vmatpush1.bf16.msra.mxu0 %v378
  %410 = vmatprep.subr.bf16.mxu0 0
  %411 = vmatpush2.bf16.msra.mxu0 0
  %412 = vmatprep.subr.bf16.mxu0 0
  %413 = vmatpush2.bf16.msra.mxu0 0
  %414 = vmatprep.subr.bf16.mxu0 0
  %415 = vmatpush2.bf16.msra.mxu0 0
  %416 = vmatprep.subr.bf16.mxu0 0
  %417 = vmatpush2.bf16.msra.mxu0 0
  %418 = vmatprep.subr.bf16.mxu0 0
  %419 = vmatpush2.bf16.msra.mxu0 0
  %420 = vmatprep.subr.bf16.mxu0 0
  %421 = vmatpush2.bf16.msra.mxu0 0
  %422 = vmatprep.subr.bf16.mxu0 0
  %423 = vmatpush2.bf16.msra.mxu0 0
  %424 = vmatprep.subr.bf16.mxu0 0
  %425 = vmatpush2.bf16.msra.mxu0 0
  %426 = vmatprep.mubr.bf16.mxu0 0
  %427 = vmatmul.mubr.bf16.gmra.mxu0 %v322
  %v428 = vpop.f32.mrf.mxu0
  %v429 = vadd.f32 %v344, %v428
  %v430 = vpop.f32.mrf.mxu0
  %v431 = vpop.f32.mrf.mxu0
  %v432 = vadd.f32 %v344, %v431
  %v433 = vpop.f32.mrf.mxu0
  %434 = vdwg.mxu0
  %v435 = vmax.f32 %v429, 0.0
  %v436 = vmax.f32 %v432, 0.0
  %v437 = vld [vmem:[%s7] sm:$0x1]
  %v438 = vld [vmem:[#allocation2] sm:$0x1]
  %440 = vset.pattern.permute.xlu0 0
  %441 = vperm.xlu0 %440, %v438
  %v442 = vpop.permute.xlu0 %441
  %v444 = vlaneseq
  %v445 = vshrl.u32 %v444, 7
  %v446 = vsub.s32 0, %v445
  %v447 = vrot.slane %v442, %v446
  %vm448 = vcmask 523264
  %v450 = vsel %vm448, %v437, 0
  %v453 = vsel %vm448, %v435, 0
  %v456 = vsel %vm448, %v436, 0
  %458 = vmatprep.subr.mxu0 0.0
  %459 = vmatpush1.xpose.msra.mxu0 0.0
  %460 = vmatprep.subr.mxu0 0.0
  %461 = vmatpush1.xpose.msra.mxu0 0.0
  %462 = vmatprep.subr.mxu0 0.0
  %463 = vmatpush1.xpose.msra.mxu0 0.0
  %464 = vmatprep.subr.mxu0 0.0
  %465 = vmatpush1.xpose.msra.mxu0 0.0
  %466 = vmatprep.subr.mxu0 0.0
  %467 = vmatpush1.xpose.msra.mxu0 0.0
  %468 = vmatprep.subr.mxu0 0.0
  %469 = vmatpush1.xpose.msra.mxu0 0.0
  %470 = vmatprep.subr.mxu0 0.0
  %471 = vmatpush1.xpose.msra.mxu0 0.0
  %472 = vmatprep.subr.mxu0 0.0
  %473 = vmatpush1.xpose.msra.mxu0 0.0
  %474 = vmatprep.subr.mxu0 0.0
  %475 = vmatpush1.xpose.msra.mxu0 0.0
  %476 = vmatprep.subr.mxu0 0.0
  %477 = vmatpush1.xpose.msra.mxu0 0.0
  %478 = vmatprep.subr.mxu0 0.0
  %479 = vmatpush1.xpose.msra.mxu0 0.0
  %480 = vmatprep.subr.mxu0 0.0
  %481 = vmatpush1.xpose.msra.mxu0 0.0
  %482 = vmatprep.subr.mxu0 0.0
  %483 = vmatpush1.xpose.msra.mxu0 0.0
  %484 = vmatprep.subr.mxu0 0.0
  %485 = vmatpush1.xpose.msra.mxu0 0.0
  %486 = vmatprep.subr.mxu0 0.0
  %487 = vmatpush1.xpose.msra.mxu0 %v456
  %488 = vmatprep.subr.mxu0 0.0
  %489 = vmatpush1.xpose.msra.mxu0 %v453
  %490 = vmatprep.subr.mxu0 0.0
  %491 = vmatpush2.xpose.msra.mxu0 0.0
  %492 = vmatprep.subr.mxu0 0.0
  %493 = vmatpush2.xpose.msra.mxu0 0.0
  %494 = vmatprep.subr.mxu0 0.0
  %495 = vmatpush2.xpose.msra.mxu0 0.0
  %496 = vmatprep.subr.mxu0 0.0
  %497 = vmatpush2.xpose.msra.mxu0 0.0
  %498 = vmatprep.subr.mxu0 0.0
  %499 = vmatpush2.xpose.msra.mxu0 0.0
  %500 = vmatprep.subr.mxu0 0.0
  %501 = vmatpush2.xpose.msra.mxu0 0.0
  %502 = vmatprep.subr.mxu0 0.0
  %503 = vmatpush2.xpose.msra.mxu0 0.0
  %504 = vmatprep.subr.mxu0 0.0
  %505 = vmatpush2.xpose.msra.mxu0 0.0
  %506 = vmatprep.subr.mxu0 0.0
  %507 = vmatpush2.xpose.msra.mxu0 0.0
  %508 = vmatprep.subr.mxu0 0.0
  %509 = vmatpush2.xpose.msra.mxu0 0.0
  %510 = vmatprep.subr.mxu0 0.0
  %511 = vmatpush2.xpose.msra.mxu0 0.0
  %512 = vmatprep.subr.mxu0 0.0
  %513 = vmatpush2.xpose.msra.mxu0 0.0
  %514 = vmatprep.subr.mxu0 0.0
  %515 = vmatpush2.xpose.msra.mxu0 0.0
  %516 = vmatprep.subr.mxu0 0.0
  %517 = vmatpush2.xpose.msra.mxu0 0.0
  %518 = vmatprep.subr.mxu0 0.0
  %519 = vmatpush2.xpose.msra.mxu0 0.0
  %520 = vmatprep.subr.mxu0 0.0
  %521 = vmatpush2.xpose.msra.mxu0 0.0
  %522 = vmatprep.mubr.f32.mxu0 0.0
  %523 = vmatmul.mubr.f32.gmra.mxu0 %v450
  %v524 = vpop.f32.mrf.mxu0
  %v525 = vadd.f32 %v447, %v524
  %v526 = vpop.f32.mrf.mxu0
  %527 = vdwg.mxu0
  %v528 = vsub.f32 0.0, %v525
  %v529 = vmul.f32 %v528, 1.442695
  %v530 = vpow.pop %v529
  %v531 = vadd.f32 %v530, 1.0
  %v532 = vrcp.pop %v531
  %v533 = vmul.f32 1.0, %v532
  %vm534 = vcmask 122880
  %535 = vst.msk [vmem:[%s9] sm:$0x1] %vm534, %v533
  // Predicated region
  $region38: #{trajectory_classifier_forward.1} parent=0 // pred_check
    _
  $region39: #{trajectory_classifier_forward.1} parent=0 // pred_check_branch
    %537 = sbr.rel (0) target = $region41
  $region40: #{trajectory_classifier_forward.1} parent=0 // pred_region
    _
  $region41: #{trajectory_classifier_forward.1} parent=0 // pred_fallthru
    _
  // Predicated region
  $region42: #{trajectory_classifier_forward.1} parent=0 // pred_check
    _
  $region43: #{trajectory_classifier_forward.1} parent=0 // pred_check_branch
    %539 = sbr.rel (0) target = $region45
  $region44: #{trajectory_classifier_forward.1} parent=0 // pred_region
    _
  $region45: #{trajectory_classifier_forward.1} parent=0 // pred_fallthru
    _

</llo_original>
